<compile_context>
chip_gen: v5e
topology: v5e:2x2
jax: 0.10.0
libtpu: 0.0.40
codegen_flags: <defaults>
</compile_context>

<pallas_src>
import functools

import jax
import jax.numpy as jnp
from jax.experimental import pallas as pl
from jax.experimental.pallas import tpu as pltpu


def _concat_fc_kernel(v_ref, a_ref, wv_ref, wa_ref, b_ref, o_ref):
    # v_ref: (TILE_M, Dv), a_ref: (TILE_M, Da)      -- per-tile inputs
    # wv_ref: (Dv, N), wa_ref: (Da, N), b_ref: (1, N) -- VMEM-resident params
    # o_ref: (TILE_M, N)                            -- per-tile output
    #
    # cat(v, a) @ W == v @ W[:Dv] + a @ W[Dv:]  (exact up to f32 reassociation).
    acc = jnp.dot(v_ref[...], wv_ref[...], preferred_element_type=jnp.float32)
    acc = acc + jnp.dot(a_ref[...], wa_ref[...],
                        preferred_element_type=jnp.float32)
    o_ref[...] = (acc + b_ref[...]).astype(o_ref.dtype)


def feature_concat_fc(visual, audio, weight, bias, *, tile_m=1024):
    """visual: (B, T, Dv), audio: (B, T, Da), weight: (Dv+Da, N), bias: (N,)."""
    B, T, Dv = visual.shape
    Ba, Ta, Da = audio.shape
    assert (B, T) == (Ba, Ta)
    K, N = weight.shape
    assert K == Dv + Da
    M = B * T

    # Flatten (B, T) -> M rows (row-major collapse, no data movement);
    # features stay on the lane axis.
    v2 = visual.reshape(M, Dv)
    a2 = audio.reshape(M, Da)
    b2 = bias.reshape(1, N)

    # Split weight once in the wrapper (K x N is tiny vs. M-row traffic);
    # each half becomes a cleanly-aligned, VMEM-resident BlockSpec.
    w_v = weight[:Dv, :]
    w_a = weight[Dv:, :]

    # Row tiling: block sublane dim must be a multiple of 8 or the full dim.
    if M <= tile_m:
        tile_m = M          # full-dim block: always legal
    grid_m = pl.cdiv(M, tile_m)  # tile_m=1024 is a multiple of 8; last tile
                                 # may be partial (handled by Pallas).

    cost = pl.CostEstimate(
        flops=2 * M * K * N,
        transcendentals=0,
        bytes_accessed=4 * (M * K + K * N + N + M * N),
    )

    out = pl.pallas_call(
        _concat_fc_kernel,
        out_shape=jax.ShapeDtypeStruct((M, N), jnp.float32),
        grid_spec=pltpu.PrefetchScalarGridSpec(
            num_scalar_prefetch=0,
            grid=(grid_m,),
            in_specs=[
                pl.BlockSpec((tile_m, Dv), lambda i: (i, 0)),  # visual tile
                pl.BlockSpec((tile_m, Da), lambda i: (i, 0)),  # audio tile
                pl.BlockSpec((Dv, N), lambda i: (0, 0)),       # resident W[:Dv]
                pl.BlockSpec((Da, N), lambda i: (0, 0)),       # resident W[Dv:]
                pl.BlockSpec((1, N), lambda i: (0, 0)),         # resident bias
            ],
            out_specs=pl.BlockSpec((tile_m, N), lambda i: (i, 0)),
        ),
        compiler_params=pltpu.CompilerParams(
            dimension_semantics=("parallel",),          # megacore-shard rows
            vmem_limit_bytes=32 * 1024 * 1024,          # safe on v5e/v6e/v7x
        ),
        cost_estimate=cost,
    )(v2, a2, w_v, w_a, b2)

    return out.reshape(B, T, N)


if __name__ == "__main__":
    # Small shapes consistent with the forward: (batch, seq, feature_dim).
    B, T = 2, 8
    visual_dim, audio_dim = 32, 16
    out_dim = 512

    key = jax.random.PRNGKey(0)
    kv, ka, kw, kb = jax.random.split(key, 4)

    visual = jax.random.normal(kv, (B, T, visual_dim), dtype=jnp.float32)
    audio = jax.random.normal(ka, (B, T, audio_dim), dtype=jnp.float32)

    # Deterministic parameter init (nn.Linear(visual_dim+audio_dim, 512)).
    # PyTorch stores weight as (512, Dv+Da); we keep its transpose (Dv+Da, 512).
    fan_in = visual_dim + audio_dim
    bound = 1.0 / (fan_in ** 0.5)
    weight = jax.random.uniform(kw, (fan_in, out_dim), dtype=jnp.float32,
                                minval=-bound, maxval=bound)
    bias = jax.random.uniform(kb, (out_dim,), dtype=jnp.float32,
                              minval=-bound, maxval=bound)

    out = feature_concat_fc(visual, audio, weight, bias)
    out = jax.block_until_ready(out)

    # Reference (plain JAX) check of concat + linear semantics.
    ref = jnp.concatenate([visual, audio], axis=2) @ weight + bias
    assert out.shape == (B, T, out_dim)
    assert jnp.allclose(out, ref, atol=1e-5, rtol=1e-5)

    print("KERNEL_OK")
</pallas_src>

<mosaic_0001>
module attributes {stable_mosaic.version = 11 : i64} {
  func.func @_concat_fc_kernel(%arg0: i32, %arg1: memref<16x32xf32, #tpu.memory_space<vmem>>, %arg2: memref<16x16xf32, #tpu.memory_space<vmem>>, %arg3: memref<32x512xf32, #tpu.memory_space<vmem>>, %arg4: memref<16x512xf32, #tpu.memory_space<vmem>>, %arg5: memref<1x512xf32, #tpu.memory_space<vmem>>, %arg6: memref<16x512xf32, #tpu.memory_space<vmem>>) attributes {dimension_semantics = [#tpu.dimension_semantics<parallel>], iteration_bounds = array<i64: 1>, scalar_prefetch = 0 : i64, scratch_operands = 0 : i64, tpu.core_type = #tpu.core_type<tc>, window_params = [{transform_indices = @transform_0, window_bounds = array<i64: 16, 32>}, {transform_indices = @transform_1, window_bounds = array<i64: 16, 16>}, {pipeline_mode = #tpu.pipeline_mode<synchronous>, transform_indices = @transform_2, window_bounds = array<i64: 32, 512>}, {pipeline_mode = #tpu.pipeline_mode<synchronous>, transform_indices = @transform_3, window_bounds = array<i64: 16, 512>}, {pipeline_mode = #tpu.pipeline_mode<synchronous>, transform_indices = @transform_4, window_bounds = array<i64: 1, 512>}, {transform_indices = @transform_5, window_bounds = array<i64: 16, 512>}]} {
    %c0 = arith.constant 0 : index
    %c0_0 = arith.constant 0 : index
    %0 = vector.load %arg1[%c0, %c0_0] : memref<16x32xf32, #tpu.memory_space<vmem>>, vector<16x32xf32>
    %c0_1 = arith.constant 0 : index
    %c0_2 = arith.constant 0 : index
    %1 = vector.load %arg3[%c0_1, %c0_2] : memref<32x512xf32, #tpu.memory_space<vmem>>, vector<32x512xf32>
    %cst = arith.constant dense<0.000000e+00> : vector<16x512xf32>
    %2 = tpu.matmul %0, %1, %cst {dimension_numbers = #tpu.dot_dimension_numbers<[1], [0], [0], [1], [0, 0, 1, 1], [], []>} : vector<16x32xf32>, vector<32x512xf32>, vector<16x512xf32> -> vector<16x512xf32>
    %c0_3 = arith.constant 0 : index
    %c0_4 = arith.constant 0 : index
    %3 = vector.load %arg2[%c0_3, %c0_4] : memref<16x16xf32, #tpu.memory_space<vmem>>, vector<16x16xf32>
    %c0_5 = arith.constant 0 : index
    %c0_6 = arith.constant 0 : index
    %4 = vector.load %arg4[%c0_5, %c0_6] : memref<16x512xf32, #tpu.memory_space<vmem>>, vector<16x512xf32>
    %cst_7 = arith.constant dense<0.000000e+00> : vector<16x512xf32>
    %5 = tpu.matmul %3, %4, %cst_7 {dimension_numbers = #tpu.dot_dimension_numbers<[1], [0], [0], [1], [0, 0, 1, 1], [], []>} : vector<16x16xf32>, vector<16x512xf32>, vector<16x512xf32> -> vector<16x512xf32>
    %6 = arith.addf %2, %5 : vector<16x512xf32>
    %c0_8 = arith.constant 0 : index
    %c0_9 = arith.constant 0 : index
    %7 = vector.load %arg5[%c0_8, %c0_9] : memref<1x512xf32, #tpu.memory_space<vmem>>, vector<1x512xf32>
    %8 = vector.broadcast %7 : vector<1x512xf32> to vector<16x512xf32>
    %9 = arith.addf %6, %8 : vector<16x512xf32>
    %c0_10 = arith.constant 0 : index
    %c0_11 = arith.constant 0 : index
    %10 = vector.load %arg6[%c0_10, %c0_11] : memref<16x512xf32, #tpu.memory_space<vmem>>, vector<16x512xf32>
    tpu.vector_store %arg6[%c0_10, %c0_11], %9 {strides = array<i32>} : memref<16x512xf32, #tpu.memory_space<vmem>>, vector<16x512xf32>,
    return
  }
  func.func @transform_0(%arg0: i32) -> (i32, i32) {
    %c0_i32 = arith.constant 0 : i32
    %c0_i32_0 = arith.constant 0 : i32
    return %arg0, %c0_i32 : i32, i32
  }
  func.func @transform_1(%arg0: i32) -> (i32, i32) {
    %c0_i32 = arith.constant 0 : i32
    %c0_i32_0 = arith.constant 0 : i32
    return %arg0, %c0_i32 : i32, i32
  }
  func.func @transform_2(%arg0: i32) -> (i32, i32) {
    %c0_i32 = arith.constant 0 : i32
    %c0_i32_0 = arith.constant 0 : i32
    %c0_i32_1 = arith.constant 0 : i32
    return %c0_i32, %c0_i32_0 : i32, i32
  }
  func.func @transform_3(%arg0: i32) -> (i32, i32) {
    %c0_i32 = arith.constant 0 : i32
    %c0_i32_0 = arith.constant 0 : i32
    %c0_i32_1 = arith.constant 0 : i32
    return %c0_i32, %c0_i32_0 : i32, i32
  }
  func.func @transform_4(%arg0: i32) -> (i32, i32) {
    %c0_i32 = arith.constant 0 : i32
    %c0_i32_0 = arith.constant 0 : i32
    %c0_i32_1 = arith.constant 0 : i32
    return %c0_i32, %c0_i32_0 : i32, i32
  }
  func.func @transform_5(%arg0: i32) -> (i32, i32) {
    %c0_i32 = arith.constant 0 : i32
    %c0_i32_0 = arith.constant 0 : i32
    return %arg0, %c0_i32 : i32, i32
  }
}

</mosaic_0001>

<llo_original>
// kernel: tpu_custom_call.1
$region0: #{tpu_custom_call.1}
  #allocation0 [shape = 'u32[]', space=smem, size = 0x4, offset = 0x4, fixed_abs, tag = 'smem constant byte address 0x4 - core index']
  #allocation1 [shape = 'u32[72,128]{1,0:T(1,128)}', space=vmem, size = 0x9000, scoped, tag = 'internal scratch']
  %s0 = inlined_call_operand.hbm [shape: f32[16,32], index: 0, kind: input, shape index: {}]
  %s1 = inlined_call_operand.hbm [shape: f32[16,16], index: 1, kind: input, shape index: {}]
  %s2 = inlined_call_operand.hbm [shape: f32[32,512], index: 2, kind: input, shape index: {}]
  %s3 = inlined_call_operand.hbm [shape: f32[16,512], index: 3, kind: input, shape index: {}]
  %s4 = inlined_call_operand.hbm [shape: f32[1,512], index: 4, kind: input, shape index: {}]
  %s5 = inlined_call_operand.hbm [shape: f32[16,512], index: 5, kind: output, shape index: {}]
  %s6 = sld [smem:[#allocation0]]
  $region50: #{tpu_custom_call.1} parent=0
    _
  %s8 = ssub.s32 1, %s6
  %s9 = scalar_select 0, %s8, %s6
  $region1: #{tpu_custom_call.1} parent=0
    #allocation2 [shape = 'u8[8192]{0}', space=vmem, size = 0x2000, scoped, tag = 'input window, operand 0, single buffered']
    #allocation3 [shape = 's32[1]{0}', space=sflag, size = 0x4, scoped, tag = 'scoped memory for tpu_custom_call.1']
    #allocation4 [shape = 's32[1]{0}', space=sflag, size = 0x4, scoped, tag = 'scoped memory for tpu_custom_call.1']
    #allocation5 [shape = 'u8[8192]{0}', space=vmem, size = 0x2000, scoped, tag = 'input window, operand 1, single buffered']
    #allocation6 [shape = 's32[1]{0}', space=sflag, size = 0x4, scoped, tag = 'scoped memory for tpu_custom_call.1']
    #allocation7 [shape = 'u8[65536]{0}', space=vmem, size = 0x10000, scoped, tag = 'input window, operand 2, single buffered']
    #allocation8 [shape = 'u8[32768]{0}', space=vmem, size = 0x8000, scoped, tag = 'input window, operand 3, single buffered']
    #allocation9 [shape = 's32[1]{0}', space=sflag, size = 0x4, scoped, tag = 'scoped memory for tpu_custom_call.1']
    #allocation10 [shape = 'u8[2048]{0}', space=vmem, size = 0x800, scoped, tag = 'input window, operand 4, single buffered']
    #allocation11 [shape = 'u8[32768]{0}', space=vmem, size = 0x8000, scoped, tag = 'output window, operand 0, single buffered']
    %10 = vsyncpa [#allocation3], 0
    %11 = vsyncpa [#allocation6], 0
    %12 = vsyncpa [#allocation9], 0
    %13 = vsyncpa [#allocation4], 0
    // Predicated region
    $region2: #{tpu_custom_call.1} parent=1 // pred_check
      _
    $region3: #{tpu_custom_call.1} parent=1 // pred_check_branch
      %15 = sbr.rel (0) target = $region5
    $region4: #{tpu_custom_call.1} parent=1 // pred_region
      %17 = vsyncadd [#allocation3], 0
      %s18 = sshll.u32 %s0, 4
      %s19 = int_to_ptr.hbm [resolvable:$true] %s18
      %s20 = sshll.u32 [#allocation2], 4
      %s21 = int_to_ptr.vmem [resolvable:$true] %s20
      %26 = dma.hbm_to_vmem [thread:$0]  %s19, 256, %s21, [#allocation3], 128, 128, 8
    $region5: #{tpu_custom_call.1} parent=1 // pred_fallthru
      _
    // Predicated region
    $region6: #{tpu_custom_call.1} parent=1 // pred_check
      _
    $region7: #{tpu_custom_call.1} parent=1 // pred_check_branch
      %28 = sbr.rel (0) target = $region9
    $region8: #{tpu_custom_call.1} parent=1 // pred_region
      %30 = vsyncadd [#allocation6], 0
      %s31 = sshll.u32 %s1, 4
      %s32 = int_to_ptr.hbm [resolvable:$true] %s31
      %s33 = sshll.u32 [#allocation5], 4
      %s34 = int_to_ptr.vmem [resolvable:$true] %s33
      %39 = dma.hbm_to_vmem [thread:$0]  %s32, 256, %s34, [#allocation6], 128, 128, 8
    $region9: #{tpu_custom_call.1} parent=1 // pred_fallthru
      _
    // Predicated region
    $region10: #{tpu_custom_call.1} parent=1 // pred_check
      _
    $region11: #{tpu_custom_call.1} parent=1 // pred_check_branch
      %41 = sbr.rel (0) target = $region13
    $region12: #{tpu_custom_call.1} parent=1 // pred_region
      %43 = vsyncadd [#allocation6], 0
      %s44 = sshll.u32 %s2, 4
      %s45 = int_to_ptr.hbm [resolvable:$true] %s44
      %s46 = sshll.u32 [#allocation7], 4
      %s47 = int_to_ptr.vmem [resolvable:$true] %s46
      %52 = dma.hbm_to_vmem [thread:$0]  %s45, 2048, %s47, [#allocation6], 512, 512, 32
    $region13: #{tpu_custom_call.1} parent=1 // pred_fallthru
      _
    // Predicated region
    $region14: #{tpu_custom_call.1} parent=1 // pred_check
      _
    $region15: #{tpu_custom_call.1} parent=1 // pred_check_branch
      %54 = sbr.rel (0) target = $region17
    $region16: #{tpu_custom_call.1} parent=1 // pred_region
      %56 = vsyncadd [#allocation9], 0
      %s57 = sshll.u32 %s3, 4
      %s58 = int_to_ptr.hbm [resolvable:$true] %s57
      %s59 = sshll.u32 [#allocation8], 4
      %s60 = int_to_ptr.vmem [resolvable:$true] %s59
      %65 = dma.hbm_to_vmem [thread:$0]  %s58, 1024, %s60, [#allocation9], 512, 512, 32
    $region17: #{tpu_custom_call.1} parent=1 // pred_fallthru
      _
    // Predicated region
    $region18: #{tpu_custom_call.1} parent=1 // pred_check
      _
    $region19: #{tpu_custom_call.1} parent=1 // pred_check_branch
      %67 = sbr.rel (0) target = $region21
    $region20: #{tpu_custom_call.1} parent=1 // pred_region
      %69 = vsyncadd [#allocation9], 0
      %s71 = sshll.u32 %s4, 4
      %s72 = int_to_ptr.hbm [resolvable:$true] %s71
      %s73 = sshll.u32 [#allocation10], 4
      %s74 = int_to_ptr.vmem [resolvable:$true] %s73
      %76 = dma.hbm_to_vmem [thread:$0]  %s72, 64, %s74, [#allocation9]
    $region21: #{tpu_custom_call.1} parent=1 // pred_fallthru
      _
    // Predicated region
    $region22: #{tpu_custom_call.1} parent=1 // pred_check
      _
    $region23: #{tpu_custom_call.1} parent=1 // pred_check_branch
      %78 = sbr.rel (0) target = $region25
    $region24: #{tpu_custom_call.1} parent=1 // pred_region
      %80 = dma.done [#allocation3], 256
    $region25: #{tpu_custom_call.1} parent=1 // pred_fallthru
      _
    // Predicated region
    $region26: #{tpu_custom_call.1} parent=1 // pred_check
      _
    $region27: #{tpu_custom_call.1} parent=1 // pred_check_branch
      %82 = sbr.rel (0) target = $region29
    $region28: #{tpu_custom_call.1} parent=1 // pred_region
      %84 = dma.done [#allocation6], 256
    $region29: #{tpu_custom_call.1} parent=1 // pred_fallthru
      _
    // Predicated region
    $region30: #{tpu_custom_call.1} parent=1 // pred_check
      _
    $region31: #{tpu_custom_call.1} parent=1 // pred_check_branch
      %86 = sbr.rel (0) target = $region33
    $region32: #{tpu_custom_call.1} parent=1 // pred_region
      %88 = dma.done [#allocation6], 2048
    $region33: #{tpu_custom_call.1} parent=1 // pred_fallthru
      _
    // Predicated region
    $region34: #{tpu_custom_call.1} parent=1 // pred_check
      _
    $region35: #{tpu_custom_call.1} parent=1 // pred_check_branch
      %90 = sbr.rel (0) target = $region37
    $region36: #{tpu_custom_call.1} parent=1 // pred_region
      %92 = dma.done [#allocation9], 1024
    $region37: #{tpu_custom_call.1} parent=1 // pred_fallthru
      _
    // Predicated region
    $region38: #{tpu_custom_call.1} parent=1 // pred_check
      _
    $region39: #{tpu_custom_call.1} parent=1 // pred_check_branch
      %94 = sbr.rel (0) target = $region41
    $region40: #{tpu_custom_call.1} parent=1 // pred_region
      %96 = dma.done [#allocation9], 64
    $region41: #{tpu_custom_call.1} parent=1 // pred_fallthru
      _
    %v97 = vld [vmem:[#allocation2] sm:$0xff]
    %v98 = vld [vmem:[#allocation2 + $0x8] sm:$0xff]
    %v99 = vld [vmem:[#allocation7] sm:$0xff]
    %v100 = vld [vmem:[#allocation7 + $0x8] sm:$0xff]
    %v101 = vld [vmem:[#allocation7 + $0x10] sm:$0xff]
    %v102 = vld [vmem:[#allocation7 + $0x18] sm:$0xff]
    %v103 = vld [vmem:[#allocation7 + $0x20] sm:$0xff]
    %v104 = vld [vmem:[#allocation7 + $0x28] sm:$0xff]
    %v105 = vld [vmem:[#allocation7 + $0x30] sm:$0xff]
    %v106 = vld [vmem:[#allocation7 + $0x38] sm:$0xff]
    %v107 = vld [vmem:[#allocation7 + $0x40] sm:$0xff]
    %v108 = vld [vmem:[#allocation7 + $0x48] sm:$0xff]
    %v109 = vld [vmem:[#allocation7 + $0x50] sm:$0xff]
    %v110 = vld [vmem:[#allocation7 + $0x58] sm:$0xff]
    %v111 = vld [vmem:[#allocation7 + $0x60] sm:$0xff]
    %v112 = vld [vmem:[#allocation7 + $0x68] sm:$0xff]
    %v113 = vld [vmem:[#allocation7 + $0x70] sm:$0xff]
    %v114 = vld [vmem:[#allocation7 + $0x78] sm:$0xff]
    %v115 = vld [vmem:[#allocation5] sm:$0xff]
    %v116 = vld [vmem:[#allocation5 + $0x8] sm:$0xff]
    %v117 = vld [vmem:[#allocation8] sm:$0xff]
    %v118 = vld [vmem:[#allocation8 + $0x8] sm:$0xff]
    %v119 = vld [vmem:[#allocation8 + $0x10] sm:$0xff]
    %v120 = vld [vmem:[#allocation8 + $0x18] sm:$0xff]
    %v121 = vld [vmem:[#allocation8 + $0x20] sm:$0xff]
    %v122 = vld [vmem:[#allocation8 + $0x28] sm:$0xff]
    %v123 = vld [vmem:[#allocation8 + $0x30] sm:$0xff]
    %v124 = vld [vmem:[#allocation8 + $0x38] sm:$0xff]
    %vm125 = vcmask 130048
    %v127 = vsel %vm125, %v115, 0
    %v130 = vsel %vm125, %v116, 0
    %132 = vmatpush.msra.mxu0 0.0
    %133 = vmatpush.msra.mxu0 0.0
    %134 = vmatpush.msra.mxu0 0.0
    %135 = vmatpush.msra.mxu0 0.0
    %136 = vmatpush.msra.mxu0 0.0
    %137 = vmatpush.msra.mxu0 0.0
    %138 = vmatpush.msra.mxu0 0.0
    %139 = vmatpush.msra.mxu0 0.0
    %140 = vmatpush.msra.mxu0 0.0
    %141 = vmatpush.msra.mxu0 0.0
    %142 = vmatpush.msra.mxu0 0.0
    %143 = vmatpush.msra.mxu0 0.0
    %144 = vmatpush.msra.mxu0 0.0
    %145 = vmatpush.msra.mxu0 0.0
    %146 = vmatpush.msra.mxu0 %v121
    %147 = vmatpush.msra.mxu0 %v117
    %148 = vmatmul.f32.gmra.mxu0 %v127
    %v149 = vpop.f32.mrf.mxu0
    %v150 = vadd.f32 0.0, %v149
    %151 = vmatmul.f32.gmra.mxu0 %v130
    %v152 = vpop.f32.mrf.mxu0
    %v153 = vadd.f32 0.0, %v152
    %154 = vdwg.mxu0
    %155 = vmatpush.msra.mxu0 0.0
    %156 = vmatpush.msra.mxu0 0.0
    %157 = vmatpush.msra.mxu0 0.0
    %158 = vmatpush.msra.mxu0 0.0
    %159 = vmatpush.msra.mxu0 0.0
    %160 = vmatpush.msra.mxu0 0.0
    %161 = vmatpush.msra.mxu0 0.0
    %162 = vmatpush.msra.mxu0 0.0
    %163 = vmatpush.msra.mxu0 0.0
    %164 = vmatpush.msra.mxu0 0.0
    %165 = vmatpush.msra.mxu0 0.0
    %166 = vmatpush.msra.mxu0 0.0
    %167 = vmatpush.msra.mxu0 0.0
    %168 = vmatpush.msra.mxu0 0.0
    %169 = vmatpush.msra.mxu0 %v122
    %170 = vmatpush.msra.mxu0 %v118
    %171 = vmatmul.f32.gmra.mxu0 %v127
    %v172 = vpop.f32.mrf.mxu0
    %v173 = vadd.f32 0.0, %v172
    %174 = vmatmul.f32.gmra.mxu0 %v130
    %v175 = vpop.f32.mrf.mxu0
    %v176 = vadd.f32 0.0, %v175
    %177 = vdwg.mxu0
    %178 = vmatpush.msra.mxu0 0.0
    %179 = vmatpush.msra.mxu0 0.0
    %180 = vmatpush.msra.mxu0 0.0
    %181 = vmatpush.msra.mxu0 0.0
    %182 = vmatpush.msra.mxu0 0.0
    %183 = vmatpush.msra.mxu0 0.0
    %184 = vmatpush.msra.mxu0 0.0
    %185 = vmatpush.msra.mxu0 0.0
    %186 = vmatpush.msra.mxu0 0.0
    %187 = vmatpush.msra.mxu0 0.0
    %188 = vmatpush.msra.mxu0 0.0
    %189 = vmatpush.msra.mxu0 0.0
    %190 = vmatpush.msra.mxu0 0.0
    %191 = vmatpush.msra.mxu0 0.0
    %192 = vmatpush.msra.mxu0 %v123
    %193 = vmatpush.msra.mxu0 %v119
    %194 = vmatmul.f32.gmra.mxu0 %v127
    %v195 = vpop.f32.mrf.mxu0
    %v196 = vadd.f32 0.0, %v195
    %197 = vmatmul.f32.gmra.mxu0 %v130
    %v198 = vpop.f32.mrf.mxu0
    %v199 = vadd.f32 0.0, %v198
    %200 = vdwg.mxu0
    %201 = vmatpush.msra.mxu0 0.0
    %202 = vmatpush.msra.mxu0 0.0
    %203 = vmatpush.msra.mxu0 0.0
    %204 = vmatpush.msra.mxu0 0.0
    %205 = vmatpush.msra.mxu0 0.0
    %206 = vmatpush.msra.mxu0 0.0
    %207 = vmatpush.msra.mxu0 0.0
    %208 = vmatpush.msra.mxu0 0.0
    %209 = vmatpush.msra.mxu0 0.0
    %210 = vmatpush.msra.mxu0 0.0
    %211 = vmatpush.msra.mxu0 0.0
    %212 = vmatpush.msra.mxu0 0.0
    %213 = vmatpush.msra.mxu0 0.0
    %214 = vmatpush.msra.mxu0 0.0
    %215 = vmatpush.msra.mxu0 %v124
    %216 = vmatpush.msra.mxu0 %v120
    %217 = vmatmul.f32.gmra.mxu0 %v127
    %v218 = vpop.f32.mrf.mxu0
    %v219 = vadd.f32 0.0, %v218
    %220 = vmatmul.f32.gmra.mxu0 %v130
    %v221 = vpop.f32.mrf.mxu0
    %v222 = vadd.f32 0.0, %v221
    %223 = vdwg.mxu0
    %vm224 = vcmask 261120
    %v226 = vsel %vm224, %v97, 0
    %v229 = vsel %vm224, %v98, 0
    %231 = vmatpush.msra.mxu0 0.0
    %232 = vmatpush.msra.mxu0 0.0
    %233 = vmatpush.msra.mxu0 0.0
    %234 = vmatpush.msra.mxu0 0.0
    %235 = vmatpush.msra.mxu0 0.0
    %236 = vmatpush.msra.mxu0 0.0
    %237 = vmatpush.msra.mxu0 0.0
    %238 = vmatpush.msra.mxu0 0.0
    %239 = vmatpush.msra.mxu0 0.0
    %240 = vmatpush.msra.mxu0 0.0
    %241 = vmatpush.msra.mxu0 0.0
    %242 = vmatpush.msra.mxu0 0.0
    %243 = vmatpush.msra.mxu0 %v111
    %244 = vmatpush.msra.mxu0 %v107
    %245 = vmatpush.msra.mxu0 %v103
    %246 = vmatpush.msra.mxu0 %v99
    %247 = vmatmul.f32.gmra.mxu0 %v226
    %v248 = vpop.f32.mrf.mxu0
    %v249 = vadd.f32 %v150, %v248
    %250 = vmatmul.f32.gmra.mxu0 %v229
    %v251 = vpop.f32.mrf.mxu0
    %v252 = vadd.f32 %v153, %v251
    %253 = vdwg.mxu0
    %254 = vmatpush.msra.mxu0 0.0
    %255 = vmatpush.msra.mxu0 0.0
    %256 = vmatpush.msra.mxu0 0.0
    %257 = vmatpush.msra.mxu0 0.0
    %258 = vmatpush.msra.mxu0 0.0
    %259 = vmatpush.msra.mxu0 0.0
    %260 = vmatpush.msra.mxu0 0.0
    %261 = vmatpush.msra.mxu0 0.0
    %262 = vmatpush.msra.mxu0 0.0
    %263 = vmatpush.msra.mxu0 0.0
    %264 = vmatpush.msra.mxu0 0.0
    %265 = vmatpush.msra.mxu0 0.0
    %266 = vmatpush.msra.mxu0 %v112
    %267 = vmatpush.msra.mxu0 %v108
    %268 = vmatpush.msra.mxu0 %v104
    %269 = vmatpush.msra.mxu0 %v100
    %270 = vmatmul.f32.gmra.mxu0 %v226
    %v271 = vpop.f32.mrf.mxu0
    %v272 = vadd.f32 %v173, %v271
    %273 = vmatmul.f32.gmra.mxu0 %v229
    %v274 = vpop.f32.mrf.mxu0
    %v275 = vadd.f32 %v176, %v274
    %276 = vdwg.mxu0
    %277 = vmatpush.msra.mxu0 0.0
    %278 = vmatpush.msra.mxu0 0.0
    %279 = vmatpush.msra.mxu0 0.0
    %280 = vmatpush.msra.mxu0 0.0
    %281 = vmatpush.msra.mxu0 0.0
    %282 = vmatpush.msra.mxu0 0.0
    %283 = vmatpush.msra.mxu0 0.0
    %284 = vmatpush.msra.mxu0 0.0
    %285 = vmatpush.msra.mxu0 0.0
    %286 = vmatpush.msra.mxu0 0.0
    %287 = vmatpush.msra.mxu0 0.0
    %288 = vmatpush.msra.mxu0 0.0
    %289 = vmatpush.msra.mxu0 %v113
    %290 = vmatpush.msra.mxu0 %v109
    %291 = vmatpush.msra.mxu0 %v105
    %292 = vmatpush.msra.mxu0 %v101
    %293 = vmatmul.f32.gmra.mxu0 %v226
    %v294 = vpop.f32.mrf.mxu0
    %v295 = vadd.f32 %v196, %v294
    %296 = vmatmul.f32.gmra.mxu0 %v229
    %v297 = vpop.f32.mrf.mxu0
    %v298 = vadd.f32 %v199, %v297
    %299 = vdwg.mxu0
    %300 = vmatpush.msra.mxu0 0.0
    %301 = vmatpush.msra.mxu0 0.0
    %302 = vmatpush.msra.mxu0 0.0
    %303 = vmatpush.msra.mxu0 0.0
    %304 = vmatpush.msra.mxu0 0.0
    %305 = vmatpush.msra.mxu0 0.0
    %306 = vmatpush.msra.mxu0 0.0
    %307 = vmatpush.msra.mxu0 0.0
    %308 = vmatpush.msra.mxu0 0.0
    %309 = vmatpush.msra.mxu0 0.0
    %310 = vmatpush.msra.mxu0 0.0
    %311 = vmatpush.msra.mxu0 0.0
    %312 = vmatpush.msra.mxu0 %v114
    %313 = vmatpush.msra.mxu0 %v110
    %314 = vmatpush.msra.mxu0 %v106
    %315 = vmatpush.msra.mxu0 %v102
    %316 = vmatmul.f32.gmra.mxu0 %v226
    %v317 = vpop.f32.mrf.mxu0
    %v318 = vadd.f32 %v219, %v317
    %319 = vmatmul.f32.gmra.mxu0 %v229
    %v320 = vpop.f32.mrf.mxu0
    %v321 = vadd.f32 %v222, %v320
    %322 = vdwg.mxu0
    %v323 = vld [vmem:[#allocation10] sm:$0xf]
    %v325 = vperm.slane %v323, 0
    %v326 = vperm.slane %v323, 1
    %v327 = vperm.slane %v323, 2
    %v328 = vperm.slane %v323, 3
    %v333 = vadd.f32 %v249, %v325
    %v334 = vadd.f32 %v272, %v326
    %v335 = vadd.f32 %v295, %v327
    %v336 = vadd.f32 %v318, %v328
    %v337 = vadd.f32 %v252, %v325
    %v338 = vadd.f32 %v275, %v326
    %v339 = vadd.f32 %v298, %v327
    %v340 = vadd.f32 %v321, %v328
    %341 = vst [vmem:[#allocation11] sm:$0xff] %v333
    %342 = vst [vmem:[#allocation11 + $0x8] sm:$0xff] %v334
    %343 = vst [vmem:[#allocation11 + $0x10] sm:$0xff] %v335
    %344 = vst [vmem:[#allocation11 + $0x18] sm:$0xff] %v336
    %345 = vst [vmem:[#allocation11 + $0x20] sm:$0xff] %v337
    %346 = vst [vmem:[#allocation11 + $0x28] sm:$0xff] %v338
    %347 = vst [vmem:[#allocation11 + $0x30] sm:$0xff] %v339
    %348 = vst [vmem:[#allocation11 + $0x38] sm:$0xff] %v340
    // Predicated region
    $region42: #{tpu_custom_call.1} parent=1 // pred_check
      _
    $region43: #{tpu_custom_call.1} parent=1 // pred_check_branch
      %350 = sbr.rel (0) target = $region45
    $region44: #{tpu_custom_call.1} parent=1 // pred_region
      %352 = vsyncadd [#allocation4], 0
      %s353 = sshll.u32 [#allocation11], 4
      %s354 = int_to_ptr.vmem [resolvable:$true] %s353
      %s355 = sshll.u32 %s5, 4
      %s356 = int_to_ptr.hbm [resolvable:$true] %s355
      %361 = dma.vmem_to_hbm [thread:$0]  %s354, 1024, %s356, [#allocation4], 512, 512, 32
    $region45: #{tpu_custom_call.1} parent=1 // pred_fallthru
      _
    // Predicated region
    $region46: #{tpu_custom_call.1} parent=1 // pred_check
      _
    $region47: #{tpu_custom_call.1} parent=1 // pred_check_branch
      %363 = sbr.rel (0) target = $region49
    $region48: #{tpu_custom_call.1} parent=1 // pred_region
      %365 = dma.done [#allocation4], 1024
    $region49: #{tpu_custom_call.1} parent=1 // pred_fallthru
      _
    %366 = vsyncpa [#allocation3], 1
    %367 = vsyncpa [#allocation6], 1
    %368 = vsyncpa [#allocation9], 1
    %369 = vsyncpa [#allocation4], 1

</llo_original>
